<compile_context>
chip_gen: v6e
topology: v6e:2x2x1
jax: 0.10.0
libtpu: 0.0.40
codegen_flags: <defaults>
</compile_context>

<pallas_src>
import math

import jax
import jax.numpy as jnp
from jax.experimental import pallas as pl
from jax.experimental.pallas import tpu as pltpu


_GELU_C = math.sqrt(2.0 / math.pi)


def _ffn_kernel(x_ref, w1_ref, b1_ref, w2_ref, b2_ref, o_ref):
    # x_ref:  (tm, dm_pad)      input row tile (caller dtype)
    # w1_ref: (dm_pad, df_pad)  fully-resident W1^T (MXU dtype, e.g. bf16)
    # b1_ref: (1, df_pad)       f32
    # w2_ref: (df_pad, dm_pad)  fully-resident W2^T (MXU dtype)
    # b2_ref: (1, dm_pad)       f32
    # o_ref:  (tm, dm_pad)      output row tile (caller dtype)
    x = x_ref[...].astype(w1_ref.dtype)          # native MXU operands (bf16 path)
    h = jnp.dot(x, w1_ref[...], preferred_element_type=jnp.float32)
    h = h + b1_ref[...]                          # bias + NewGELU in f32
    h = 0.5 * h * (1.0 + jnp.tanh(_GELU_C * (h + 0.044715 * (h * h * h))))
    out = jnp.dot(h.astype(w2_ref.dtype), w2_ref[...],
                  preferred_element_type=jnp.float32)
    # TODO(synk): nn.Dropout(p=0.1) is identity in eval mode; training-mode
    # stochastic masking (pltpu.prng_seed / prng_random_bits) is not applied.
    o_ref[...] = (out + b2_ref[...]).astype(o_ref.dtype)


def _round_up(x, m):
    return (x + m - 1) // m * m


def _sublane(dtype):
    # Sublane packing of the vreg: 8 for f32, 16 for bf16, 32 for int8/fp8.
    return max(8, 32 // jnp.dtype(dtype).itemsize)


def _vmem_capacity_bytes():
    try:
        return int(pltpu.get_tpu_info().vmem_capacity_bytes)
    except Exception:  # conservative fallback: v7x per-TensorCore VMEM
        return 64 * 1024 * 1024


def prepare_ffn_params(w1, b1, w2, b2, *, compute_dtype=jnp.bfloat16):
    """One-time (parameter-load-time) prep, hoisted out of the per-call path.

    Args:
      w1: (d_ff, d_model)  torch `w_1.weight` layout
      b1: (d_ff,)
      w2: (d_model, d_ff)  torch `w_2.weight` layout
      b2: (d_model,)
      compute_dtype: MXU operand dtype for the weights (bf16 by default).
    Returns (w1_t, b1_2d, w2_t, b2_2d): pre-transposed, lane-padded,
    MXU-dtype weights and f32 biases.
    """
    d_ff, d_model = w1.shape
    dm_pad = _round_up(d_model, 128)
    df_pad = _round_up(d_ff, 128)
    w1_t = jnp.asarray(w1.T, dtype=compute_dtype)
    w2_t = jnp.asarray(w2.T, dtype=compute_dtype)
    if (dm_pad, df_pad) != (d_model, d_ff):
        w1_t = jnp.pad(w1_t, ((0, dm_pad - d_model), (0, df_pad - d_ff)))
        w2_t = jnp.pad(w2_t, ((0, df_pad - d_ff), (0, dm_pad - d_model)))
    b1_2d = jnp.pad(b1.astype(jnp.float32), (0, df_pad - d_ff)).reshape(1, df_pad)
    b2_2d = jnp.pad(b2.astype(jnp.float32), (0, dm_pad - d_model)).reshape(1, dm_pad)
    return w1_t, b1_2d, w2_t, b2_2d


def position_wise_feed_forward(x, w1_t, b1_2d, w2_t, b2_2d, *, tm=1024):
    """Forward pass of PositionWiseFeedForward.  Returns (out, [])."""
    batch, seq, d_model = x.shape
    dm_pad, df_pad = w1_t.shape
    M = batch * seq
    sub = _sublane(x.dtype)

    x2d = x.reshape(M, d_model)
    if dm_pad != d_model:
        # Lane (d_model) padding must be explicit zeros so padded lanes
        # contribute exactly 0 to the K reduction of matmul 1.
        x2d = jnp.pad(x2d, ((0, 0), (0, dm_pad - d_model)))

    # Row-tile selection: big tiles amortize the ~0.35us per-grid-step overhead;
    # split into >=2 tiles when possible so both v7x TensorCores get work;
    # a tile equal to the full extent needs no sublane rounding.
    if M <= tm:
        half = _round_up(pl.cdiv(M, 2), sub)
        tm = half if half < M else M
    else:
        tm = _round_up(tm, sub)

    w_isz = jnp.dtype(w1_t.dtype).itemsize
    x_isz = jnp.dtype(x.dtype).itemsize

    def _vmem_est(tm_):
        return (2 * tm_ * dm_pad * 2 * x_isz          # double-buffered x & out tiles
                + 2 * 2 * dm_pad * df_pad * w_isz     # resident W1^T, W2^T
                + 2 * 4 * (df_pad + dm_pad)           # biases (f32)
                + tm_ * df_pad * 4)                   # f32 activation h

    vmem_cap = _vmem_capacity_bytes() * 3 // 4        # headroom; respects v7x 64 MiB
    while _vmem_est(tm) > vmem_cap and tm > sub:
        new_tm = max(sub, _round_up(tm // 2, sub))
        if new_tm == tm:
            break
        tm = new_tm

    grid = (pl.cdiv(M, tm),)

    cost = pl.CostEstimate(
        flops=4 * M * dm_pad * df_pad,                # two matmuls
        transcendentals=M * df_pad,                   # one tanh per hidden element
        bytes_accessed=int(x2d.size * x_isz
                           + (w1_t.size + w2_t.size) * w_isz
                           + (b1_2d.size + b2_2d.size) * 4
                           + M * dm_pad * x_isz))

    out2d = pl.pallas_call(
        _ffn_kernel,
        out_shape=jax.ShapeDtypeStruct((M, dm_pad), x.dtype),
        grid_spec=pltpu.PrefetchScalarGridSpec(
            num_scalar_prefetch=0,
            grid=grid,
            in_specs=[
                pl.BlockSpec((tm, dm_pad), lambda i: (i, 0)),      # x row tile
                pl.BlockSpec((dm_pad, df_pad), lambda i: (0, 0)),  # W1^T (resident)
                pl.BlockSpec((1, df_pad), lambda i: (0, 0)),       # b1   (resident)
                pl.BlockSpec((df_pad, dm_pad), lambda i: (0, 0)),  # W2^T (resident)
                pl.BlockSpec((1, dm_pad), lambda i: (0, 0)),       # b2   (resident)
            ],
            out_specs=pl.BlockSpec((tm, dm_pad), lambda i: (i, 0)),
        ),
        compiler_params=pltpu.CompilerParams(
            dimension_semantics=("parallel",),
            vmem_limit_bytes=int(min(vmem_cap, max(16 << 20, 2 * _vmem_est(tm)))),
        ),
        cost_estimate=cost,
    )(x2d, w1_t, b1_2d, w2_t, b2_2d)

    out = out2d[:, :d_model].reshape(batch, seq, d_model)
    return (out, [])


def _reference(x, w1, b1, w2, b2):
    # Pure-JAX reference using torch-layout (out, in) f32 weights.
    h = jnp.einsum("bsd,fd->bsf", x, w1) + b1
    h = 0.5 * h * (1.0 + jnp.tanh(_GELU_C * (h + 0.044715 * h ** 3)))
    return jnp.einsum("bsf,df->bsd", h, w2) + b2


def _make_params(key, d_model, d_ff=256):
    k1, k2, k3, k4 = jax.random.split(key, 4)
    bound1 = 1.0 / math.sqrt(d_model)
    w1 = jax.random.uniform(k1, (d_ff, d_model), jnp.float32, -bound1, bound1)
    b1 = jax.random.uniform(k2, (d_ff,), jnp.float32, -bound1, bound1)
    bound2 = 1.0 / math.sqrt(d_ff)
    w2 = jax.random.uniform(k3, (d_model, d_ff), jnp.float32, -bound2, bound2)
    b2 = jax.random.uniform(k4, (d_model,), jnp.float32, -bound2, bound2)
    return w1, b1, w2, b2


if __name__ == "__main__":
    key = jax.random.PRNGKey(0)
    kx1, kp1, kx2, kp2 = jax.random.split(key, 4)

    # Case 1: lane-aligned shapes, f32 end-to-end (tight numerical check;
    # also exercises the >=2-row-tile split for v7x's two TensorCores).
    batch, seq, d_model = 2, 8, 128
    x = jax.random.normal(kx1, (batch, seq, d_model), dtype=jnp.float32)
    w1, b1, w2, b2 = _make_params(kp1, d_model)
    params_f32 = prepare_ffn_params(w1, b1, w2, b2, compute_dtype=jnp.float32)
    out, extra = position_wise_feed_forward(x, *params_f32)
    out = jax.block_until_ready(out)
    ref = _reference(x, w1, b1, w2, b2)
    assert out.shape == (batch, seq, d_model) and extra == []
    assert jnp.allclose(out, ref, atol=1e-4, rtol=1e-4), "mismatch (f32 aligned)"

    # Case 2: unaligned shapes + bf16 MXU operands (lane padding, masked last
    # row tile, mixed-precision path); tolerance reflects bf16 rounding.
    batch2, seq2, d_model2 = 3, 5, 96
    x2 = jax.random.normal(kx2, (batch2, seq2, d_model2), dtype=jnp.float32)
    w1b, b1b, w2b, b2b = _make_params(kp2, d_model2)
    params_bf16 = prepare_ffn_params(w1b, b1b, w2b, b2b, compute_dtype=jnp.bfloat16)
    out2, _ = position_wise_feed_forward(x2, *params_bf16)
    out2 = jax.block_until_ready(out2)
    ref2 = _reference(x2, w1b, b1b, w2b, b2b)
    assert out2.shape == (batch2, seq2, d_model2)
    assert jnp.allclose(out2, ref2, atol=5e-2, rtol=5e-2), "mismatch (bf16 padded)"

    print("KERNEL_OK")
</pallas_src>

<mosaic_0001>
module attributes {stable_mosaic.version = 11 : i64} {
  func.func @_ffn_kernel(%arg0: i32, %arg1: memref<8x128xf32, #tpu.memory_space<vmem>>, %arg2: memref<128x256xf32, #tpu.memory_space<vmem>>, %arg3: memref<1x256xf32, #tpu.memory_space<vmem>>, %arg4: memref<256x128xf32, #tpu.memory_space<vmem>>, %arg5: memref<1x128xf32, #tpu.memory_space<vmem>>, %arg6: memref<8x128xf32, #tpu.memory_space<vmem>>) attributes {dimension_semantics = [#tpu.dimension_semantics<parallel>], iteration_bounds = array<i64: 2>, scalar_prefetch = 0 : i64, scratch_operands = 0 : i64, tpu.core_type = #tpu.core_type<tc>, window_params = [{transform_indices = @transform_0, window_bounds = array<i64: 8, 128>}, {pipeline_mode = #tpu.pipeline_mode<synchronous>, transform_indices = @transform_1, window_bounds = array<i64: 128, 256>}, {pipeline_mode = #tpu.pipeline_mode<synchronous>, transform_indices = @transform_2, window_bounds = array<i64: 1, 256>}, {pipeline_mode = #tpu.pipeline_mode<synchronous>, transform_indices = @transform_3, window_bounds = array<i64: 256, 128>}, {pipeline_mode = #tpu.pipeline_mode<synchronous>, transform_indices = @transform_4, window_bounds = array<i64: 1, 128>}, {transform_indices = @transform_5, window_bounds = array<i64: 8, 128>}]} {
    %c0 = arith.constant 0 : index
    %c0_0 = arith.constant 0 : index
    %0 = vector.load %arg1[%c0, %c0_0] : memref<8x128xf32, #tpu.memory_space<vmem>>, vector<8x128xf32>
    %c0_1 = arith.constant 0 : index
    %c0_2 = arith.constant 0 : index
    %1 = vector.load %arg2[%c0_1, %c0_2] : memref<128x256xf32, #tpu.memory_space<vmem>>, vector<128x256xf32>
    %cst = arith.constant dense<0.000000e+00> : vector<8x256xf32>
    %2 = tpu.matmul %0, %1, %cst {dimension_numbers = #tpu.dot_dimension_numbers<[1], [0], [0], [1], [0, 0, 1, 1], [], []>} : vector<8x128xf32>, vector<128x256xf32>, vector<8x256xf32> -> vector<8x256xf32>
    %c0_3 = arith.constant 0 : index
    %c0_4 = arith.constant 0 : index
    %3 = vector.load %arg3[%c0_3, %c0_4] : memref<1x256xf32, #tpu.memory_space<vmem>>, vector<1x256xf32>
    %4 = vector.broadcast %3 : vector<1x256xf32> to vector<8x256xf32>
    %5 = arith.addf %2, %4 : vector<8x256xf32>
    %cst_5 = arith.constant 5.000000e-01 : f32
    %6 = vector.broadcast %cst_5 : f32 to vector<8x256xf32>
    %7 = arith.mulf %6, %5 : vector<8x256xf32>
    %8 = arith.mulf %5, %5 : vector<8x256xf32>
    %9 = arith.mulf %8, %5 : vector<8x256xf32>
    %cst_6 = arith.constant 4.471500e-02 : f32
    %10 = vector.broadcast %cst_6 : f32 to vector<8x256xf32>
    %11 = arith.mulf %10, %9 : vector<8x256xf32>
    %12 = arith.addf %5, %11 : vector<8x256xf32>
    %cst_7 = arith.constant 0.797884583 : f32
    %13 = vector.broadcast %cst_7 : f32 to vector<8x256xf32>
    %14 = arith.mulf %13, %12 : vector<8x256xf32>
    %15 = math.tanh %14 : vector<8x256xf32>
    %cst_8 = arith.constant 1.000000e+00 : f32
    %16 = vector.broadcast %cst_8 : f32 to vector<8x256xf32>
    %17 = arith.addf %16, %15 : vector<8x256xf32>
    %18 = arith.mulf %7, %17 : vector<8x256xf32>
    %c0_9 = arith.constant 0 : index
    %c0_10 = arith.constant 0 : index
    %19 = vector.load %arg4[%c0_9, %c0_10] : memref<256x128xf32, #tpu.memory_space<vmem>>, vector<256x128xf32>
    %cst_11 = arith.constant dense<0.000000e+00> : vector<8x128xf32>
    %20 = tpu.matmul %18, %19, %cst_11 {dimension_numbers = #tpu.dot_dimension_numbers<[1], [0], [0], [1], [0, 0, 1, 1], [], []>} : vector<8x256xf32>, vector<256x128xf32>, vector<8x128xf32> -> vector<8x128xf32>
    %c0_12 = arith.constant 0 : index
    %c0_13 = arith.constant 0 : index
    %21 = vector.load %arg5[%c0_12, %c0_13] : memref<1x128xf32, #tpu.memory_space<vmem>>, vector<1x128xf32>
    %22 = vector.broadcast %21 : vector<1x128xf32> to vector<8x128xf32>
    %23 = arith.addf %20, %22 : vector<8x128xf32>
    %c0_14 = arith.constant 0 : index
    %c0_15 = arith.constant 0 : index
    %24 = vector.load %arg6[%c0_14, %c0_15] : memref<8x128xf32, #tpu.memory_space<vmem>>, vector<8x128xf32>
    tpu.vector_store %arg6[%c0_14, %c0_15], %23 {strides = array<i32>} : memref<8x128xf32, #tpu.memory_space<vmem>>, vector<8x128xf32>,
    return
  }
  func.func @transform_0(%arg0: i32) -> (i32, i32) {
    %c0_i32 = arith.constant 0 : i32
    %c0_i32_0 = arith.constant 0 : i32
    return %arg0, %c0_i32 : i32, i32
  }
  func.func @transform_1(%arg0: i32) -> (i32, i32) {
    %c0_i32 = arith.constant 0 : i32
    %c0_i32_0 = arith.constant 0 : i32
    %c0_i32_1 = arith.constant 0 : i32
    return %c0_i32, %c0_i32_0 : i32, i32
  }
  func.func @transform_2(%arg0: i32) -> (i32, i32) {
    %c0_i32 = arith.constant 0 : i32
    %c0_i32_0 = arith.constant 0 : i32
    %c0_i32_1 = arith.constant 0 : i32
    return %c0_i32, %c0_i32_0 : i32, i32
  }
  func.func @transform_3(%arg0: i32) -> (i32, i32) {
    %c0_i32 = arith.constant 0 : i32
    %c0_i32_0 = arith.constant 0 : i32
    %c0_i32_1 = arith.constant 0 : i32
    return %c0_i32, %c0_i32_0 : i32, i32
  }
  func.func @transform_4(%arg0: i32) -> (i32, i32) {
    %c0_i32 = arith.constant 0 : i32
    %c0_i32_0 = arith.constant 0 : i32
    %c0_i32_1 = arith.constant 0 : i32
    return %c0_i32, %c0_i32_0 : i32, i32
  }
  func.func @transform_5(%arg0: i32) -> (i32, i32) {
    %c0_i32 = arith.constant 0 : i32
    %c0_i32_0 = arith.constant 0 : i32
    return %arg0, %c0_i32 : i32, i32
  }
}

</mosaic_0001>

<llo_original>
// kernel: tpu_custom_call.1
$region0: #{tpu_custom_call.1}
  #allocation0 [shape = 'u32[]', space=smem, size = 0x4, offset = 0x4, fixed_abs, tag = 'smem constant byte address 0x4 - core index']
  #allocation1 [shape = 'u32[144,128]{1,0:T(1,128)}', space=vmem, size = 0x12000, scoped, tag = 'internal scratch']
  %s0 = inlined_call_operand.hbm [shape: f32[16,128], index: 0, kind: input, shape index: {}]
  %s1 = inlined_call_operand.hbm [shape: f32[128,256], index: 1, kind: input, shape index: {}]
  %s2 = inlined_call_operand.vmem [shape: f32[1,256], index: 2, kind: input, shape index: {}]
  %s3 = inlined_call_operand.hbm [shape: f32[256,128], index: 3, kind: input, shape index: {}]
  %s4 = inlined_call_operand.vmem [shape: f32[1,128], index: 4, kind: input, shape index: {}]
  %s5 = inlined_call_operand.hbm [shape: f32[16,128], index: 5, kind: output, shape index: {}]
  %s6 = sld [smem:[#allocation0]]
  $region65: #{tpu_custom_call.1} parent=0
    _
  %s8 = ssub.s32 1, %s6
  %s9 = scalar_select 0, %s8, %s6
  $region1: #{tpu_custom_call.1} parent=0
    #allocation2 [shape = 'u8[8192]{0}', space=vmem, size = 0x2000, scoped, tag = 'input window, operand 0']
    #allocation3 [shape = 's32[2]{0}', space=sflag, size = 0x8, scoped, tag = 'scoped memory for tpu_custom_call.1']
    #allocation4 [shape = 's32[2]{0}', space=sflag, size = 0x8, scoped, tag = 'scoped memory for tpu_custom_call.1']
    #allocation5 [shape = 'u8[131072]{0}', space=vmem, size = 0x20000, scoped, tag = 'input window, operand 1, single buffered']
    #allocation6 [shape = 's32[1]{0}', space=sflag, size = 0x4, scoped, tag = 'scoped memory for tpu_custom_call.1']
    #allocation7 [shape = 'u8[131072]{0}', space=vmem, size = 0x20000, scoped, tag = 'input window, operand 3, single buffered']
    #allocation8 [shape = 'u8[8192]{0}', space=vmem, size = 0x2000, scoped, tag = 'output window, operand 0']
    %10 = vsyncpa [#allocation3], 0
    %s11 = scalar_lea.sflag [#allocation3], 1
    %12 = vsyncpa %s11, 0
    %13 = vsyncpa [#allocation6], 0
    %14 = vsyncpa [#allocation4], 0
    %s15 = scalar_lea.sflag [#allocation4], 1
    %16 = vsyncpa %s15, 0
    loop: start=0, step=1, limit=4
    $region2: #{tpu_custom_call.1} parent=1 // loop_pre_header
      _
    $region3: #{tpu_custom_call.1} parent=1 // loop_header
      %s18 = sphi 0, %s22
      %p19 = scmp.ge.s32.totalorder %s18, 4
      %s28 = sphi 0, %s30
      %s31 = sphi 0, %s28
      %s32 = sphi 0, %s31
      %s48 = sphi 0, %s32
      %s52 = sphi 0, %s52
      %s54 = sphi 0, %s52
      %s55 = sphi 0, %s54
      %s69 = sphi 0, %s55
      %s73 = sphi 0, %s73
      %s75 = sphi 0, %s73
      %s76 = sphi 0, %s75
      %s90 = sphi 0, %s76
      %s94 = sphi 0, %s94
      %s96 = sphi 0, %s94
      %s97 = sphi 0, %s96
      %s111 = sphi 0, %s97
      %s115 = sphi 0, %s115
      %s117 = sphi 0, %s115
      %s118 = sphi 0, %s117
      %s132 = sphi 0, %s118
      %s138 = sphi 0, %s140
      %s141 = sphi 0, %s138
      %s142 = sphi 0, %s141
      %s158 = sphi 0, %s142
    $region4: #{tpu_custom_call.1} parent=1 // loop_header_branch
      %21 = sbr.rel (%p19) target = $region8
    $region5: #{tpu_custom_call.1} parent=1 // loop_body
      %s23 = ssub.s32 %s18, 1
      %s24 = ssub.s32 %s18, 2
      %s25 = sadd.s32 %s18, 1
      %s26 = ssub.s32 %s18, %s25
      %p27 = scmp.eq.s32.totalorder %s26, 0
      %s29 = sadd.s32 %s28, 1
      %s30 = scalar_select %p27, %s28, %s29
      %p33 = pneg %p27
      %p34 = scmp.eq.s32.totalorder %s18, 1
      %p35 = por %p33, %p34
      %p36 = scmp.ne.s32.totalorder %s28, %s31
      %p37 = scmp.eq.s32.totalorder %s18, 0
      %p38 = por %p36, %p37
      %p39 = scmp.ne.s32.totalorder %s28, %s31
      %p40 = scmp.eq.s32.totalorder %s23, 1
      %p41 = por %p39, %p40
      %p42 = scmp.ne.s32.totalorder %s31, %s32
      %p43 = scmp.eq.s32.totalorder %s23, 0
      %p44 = por %p42, %p43
      %p45 = scmp.ne.s32.totalorder %s31, %s32
      %p46 = scmp.eq.s32.totalorder %s24, 1
      %p47 = por %p45, %p46
      %p49 = scmp.ne.s32.totalorder %s32, %s48
      %p50 = scmp.eq.s32.totalorder %s24, 0
      %p51 = por %p49, %p50
      %s53 = sadd.s32 %s52, 1
      %p56 = scmp.eq.s32.totalorder %s18, 1
      %p57 = scmp.ne.s32.totalorder %s52, %s54
      %p58 = scmp.eq.s32.totalorder %s18, 0
      %p59 = por %p57, %p58
      %p60 = scmp.ne.s32.totalorder %s52, %s54
      %p61 = scmp.eq.s32.totalorder %s23, 1
      %p62 = por %p60, %p61
      %p63 = scmp.ne.s32.totalorder %s54, %s55
      %p64 = scmp.eq.s32.totalorder %s23, 0
      %p65 = por %p63, %p64
      %p66 = scmp.ne.s32.totalorder %s54, %s55
      %p67 = scmp.eq.s32.totalorder %s24, 1
      %p68 = por %p66, %p67
      %p70 = scmp.ne.s32.totalorder %s55, %s69
      %p71 = scmp.eq.s32.totalorder %s24, 0
      %p72 = por %p70, %p71
      %s74 = sadd.s32 %s73, 1
      %p77 = scmp.eq.s32.totalorder %s18, 1
      %p78 = scmp.ne.s32.totalorder %s73, %s75
      %p79 = scmp.eq.s32.totalorder %s18, 0
      %p80 = por %p78, %p79
      %p81 = scmp.ne.s32.totalorder %s73, %s75
      %p82 = scmp.eq.s32.totalorder %s23, 1
      %p83 = por %p81, %p82
      %p84 = scmp.ne.s32.totalorder %s75, %s76
      %p85 = scmp.eq.s32.totalorder %s23, 0
      %p86 = por %p84, %p85
      %p87 = scmp.ne.s32.totalorder %s75, %s76
      %p88 = scmp.eq.s32.totalorder %s24, 1
      %p89 = por %p87, %p88
      %p91 = scmp.ne.s32.totalorder %s76, %s90
      %p92 = scmp.eq.s32.totalorder %s24, 0
      %p93 = por %p91, %p92
      %s95 = sadd.s32 %s94, 1
      %p98 = scmp.eq.s32.totalorder %s18, 1
      %p99 = scmp.ne.s32.totalorder %s94, %s96
      %p100 = scmp.eq.s32.totalorder %s18, 0
      %p101 = por %p99, %p100
      %p102 = scmp.ne.s32.totalorder %s94, %s96
      %p103 = scmp.eq.s32.totalorder %s23, 1
      %p104 = por %p102, %p103
      %p105 = scmp.ne.s32.totalorder %s96, %s97
      %p106 = scmp.eq.s32.totalorder %s23, 0
      %p107 = por %p105, %p106
      %p108 = scmp.ne.s32.totalorder %s96, %s97
      %p109 = scmp.eq.s32.totalorder %s24, 1
      %p110 = por %p108, %p109
      %p112 = scmp.ne.s32.totalorder %s97, %s111
      %p113 = scmp.eq.s32.totalorder %s24, 0
      %p114 = por %p112, %p113
      %s116 = sadd.s32 %s115, 1
      %p119 = scmp.eq.s32.totalorder %s18, 1
      %p120 = scmp.ne.s32.totalorder %s115, %s117
      %p121 = scmp.eq.s32.totalorder %s18, 0
      %p122 = por %p120, %p121
      %p123 = scmp.ne.s32.totalorder %s115, %s117
      %p124 = scmp.eq.s32.totalorder %s23, 1
      %p125 = por %p123, %p124
      %p126 = scmp.ne.s32.totalorder %s117, %s118
      %p127 = scmp.eq.s32.totalorder %s23, 0
      %p128 = por %p126, %p127
      %p129 = scmp.ne.s32.totalorder %s117, %s118
      %p130 = scmp.eq.s32.totalorder %s24, 1
      %p131 = por %p129, %p130
      %p133 = scmp.ne.s32.totalorder %s118, %s132
      %p134 = scmp.eq.s32.totalorder %s24, 0
      %p135 = por %p133, %p134
      %s136 = ssub.s32 %s18, %s25
      %p137 = scmp.eq.s32.totalorder %s136, 0
      %s139 = sadd.s32 %s138, 1
      %s140 = scalar_select %p137, %s138, %s139
      %p143 = pneg %p137
      %p144 = scmp.eq.s32.totalorder %s18, 1
      %p145 = por %p143, %p144
      %p146 = scmp.ne.s32.totalorder %s138, %s141
      %p147 = scmp.eq.s32.totalorder %s18, 0
      %p148 = por %p146, %p147
      %p149 = scmp.ne.s32.totalorder %s138, %s141
      %p150 = scmp.eq.s32.totalorder %s23, 1
      %p151 = por %p149, %p150
      %p152 = scmp.ne.s32.totalorder %s141, %s142
      %p153 = scmp.eq.s32.totalorder %s23, 0
      %p154 = por %p152, %p153
      %p155 = scmp.ne.s32.totalorder %s141, %s142
      %p156 = scmp.eq.s32.totalorder %s24, 1
      %p157 = por %p155, %p156
      %p159 = scmp.ne.s32.totalorder %s142, %s158
      %p160 = scmp.eq.s32.totalorder %s24, 0
      %p161 = por %p159, %p160
      %p162 = scmp.le.s32.totalorder 1, %s18
      %p163 = scmp.lt.s32.totalorder %s18, 3
      %p164 = pnand %p162, %p163
      %p165 = pneg %p164
      // Predicated region
      $region9: #{tpu_custom_call.1} parent=5 // pred_check
        _
      $region10: #{tpu_custom_call.1} parent=5 // pred_check_branch
        %167 = sbr.rel (%p164) target = $region12
      $region11: #{tpu_custom_call.1} parent=5 // pred_region
        %s168 = ssub.s32 %s18, 1
        // Predicated region
        $region13: #{tpu_custom_call.1} parent=11 // pred_check
          %p169 = pneg %p65
        $region14: #{tpu_custom_call.1} parent=11 // pred_check_branch
          %171 = sbr.rel (%p169) target = $region16
        $region15: #{tpu_custom_call.1} parent=11 // pred_region
          %s173 = ssub.s32 4096, 4096
          %174 = vsyncadd [#allocation6], %s173
          %s175 = sshll.u32 [#allocation5], 4
          %s176 = int_to_ptr.vmem [resolvable:$true] %s175
          %181 = dma.hbm_to_vmem [thread:$0]  %s1, 4096, %s176, [#allocation6], 256, 256, 16
        $region16: #{tpu_custom_call.1} parent=11 // pred_fallthru
          _
        // Predicated region
        $region17: #{tpu_custom_call.1} parent=11 // pred_check
          %p182 = pneg %p86
        $region18: #{tpu_custom_call.1} parent=11 // pred_check_branch
          %184 = sbr.rel (%p182) target = $region20
        $region19: #{tpu_custom_call.1} parent=11 // pred_region
          _
        $region20: #{tpu_custom_call.1} parent=11 // pred_fallthru
          _
        // Predicated region
        $region21: #{tpu_custom_call.1} parent=11 // pred_check
          %p185 = pneg %p107
        $region22: #{tpu_custom_call.1} parent=11 // pred_check_branch
          %187 = sbr.rel (%p185) target = $region24
        $region23: #{tpu_custom_call.1} parent=11 // pred_region
          %s189 = ssub.s32 4096, 4096
          %190 = vsyncadd [#allocation6], %s189
          %s191 = sshll.u32 [#allocation7], 4
          %s192 = int_to_ptr.vmem [resolvable:$true] %s191
          %197 = dma.hbm_to_vmem [thread:$0]  %s3, 4096, %s192, [#allocation6], 128, 128, 8
        $region24: #{tpu_custom_call.1} parent=11 // pred_fallthru
          _
        // Predicated region
        $region25: #{tpu_custom_call.1} parent=11 // pred_check
          %p198 = pneg %p128
        $region26: #{tpu_custom_call.1} parent=11 // pred_check_branch
          %200 = sbr.rel (%p198) target = $region28
        $region27: #{tpu_custom_call.1} parent=11 // pred_region
          _
        $region28: #{tpu_custom_call.1} parent=11 // pred_fallthru
          _
      $region12: #{tpu_custom_call.1} parent=5 // pred_fallthru
        _
      %p201 = scmp.lt.s32.totalorder %s18, 2
      // Predicated region
      $region29: #{tpu_custom_call.1} parent=5 // pred_check
        %p202 = pneg %p201
      $region30: #{tpu_custom_call.1} parent=5 // pred_check_branch
        %204 = sbr.rel (%p202) target = $region32
      $region31: #{tpu_custom_call.1} parent=5 // pred_region
        // Predicated region
        $region33: #{tpu_custom_call.1} parent=31 // pred_check
          %p205 = pneg %p38
        $region34: #{tpu_custom_call.1} parent=31 // pred_check_branch
          %207 = sbr.rel (%p205) target = $region36
        $region35: #{tpu_custom_call.1} parent=31 // pred_region
          %s208 = sand.u32 %s28, 1
          %s209 = scalar_lea.sflag [#allocation3], %s208
          %s210 = sand.u32 %s28, 1
          %s211 = smul.addr %s210, 8
          %s212 = scalar_lea.vmem [#allocation2], %s211
          %s214 = ssub.s32 128, 128
          %215 = vsyncadd %s209, %s214
          %s216 = smul.addr %s18, 128
          %s217 = scalar_lea.hbm %s0, %s216
          %s219 = sshll.u32 %s212, 4
          %s220 = int_to_ptr.vmem [resolvable:$true] %s219
          %222 = dma.hbm_to_vmem [thread:$0]  %s217, 128, %s220, %s209
        $region36: #{tpu_custom_call.1} parent=31 // pred_fallthru
          _
      $region32: #{tpu_custom_call.1} parent=5 // pred_fallthru
        _
      %p223 = scmp.le.s32.totalorder 1, %s18
      %p224 = scmp.lt.s32.totalorder %s18, 3
      %p225 = pnand %p223, %p224
      %p226 = pneg %p225
      // Predicated region
      $region37: #{tpu_custom_call.1} parent=5 // pred_check
        _
      $region38: #{tpu_custom_call.1} parent=5 // pred_check_branch
        %228 = sbr.rel (%p225) target = $region40
      $region39: #{tpu_custom_call.1} parent=5 // pred_region
        %s229 = ssub.s32 %s18, 1
        %s230 = sand.u32 %s31, 1
        %s231 = scalar_lea.sflag [#allocation3], %s230
        %s232 = sand.u32 %s31, 1
        %s233 = smul.addr %s232, 8
        %s234 = scalar_lea.vmem [#allocation2], %s233
        // Predicated region
        $region41: #{tpu_custom_call.1} parent=39 // pred_check
          %p235 = pneg %p44
        $region42: #{tpu_custom_call.1} parent=39 // pred_check_branch
          %237 = sbr.rel (%p235) target = $region44
        $region43: #{tpu_custom_call.1} parent=39 // pred_region
          %238 = dma.done %s231, 128
        $region44: #{tpu_custom_call.1} parent=39 // pred_fallthru
          _
        // Predicated region
        $region45: #{tpu_custom_call.1} parent=39 // pred_check
          %p239 = pneg %p65
        $region46: #{tpu_custom_call.1} parent=39 // pred_check_branch
          %241 = sbr.rel (%p239) target = $region48
        $region47: #{tpu_custom_call.1} parent=39 // pred_region
          %242 = dma.done [#allocation6], 4096
        $region48: #{tpu_custom_call.1} parent=39 // pred_fallthru
          _
        // Predicated region
        $region49: #{tpu_custom_call.1} parent=39 // pred_check
          %p243 = pneg %p107
        $region50: #{tpu_custom_call.1} parent=39 // pred_check_branch
          %245 = sbr.rel (%p243) target = $region52
        $region51: #{tpu_custom_call.1} parent=39 // pred_region
          %246 = dma.done [#allocation6], 4096
        $region52: #{tpu_custom_call.1} parent=39 // pred_fallthru
          _
        %s247 = sand.u32 %s31, 1
        %s248 = scalar_lea.sflag [#allocation3], %s247
        %s249 = sand.u32 %s31, 1
        %s250 = smul.addr %s249, 8
        %s251 = scalar_lea.vmem [#allocation2], %s250
        %p252 = pneg %p44
        %p253 = pneg %p41
        %p254 = pneg %p65
        %p255 = pneg %p62
        %p256 = pneg %p86
        %p257 = pneg %p83
        %p258 = pneg %p107
        %p259 = pneg %p104
        %p260 = pneg %p128
        %p261 = pneg %p125
        %p262 = pneg %p154
        %p263 = pneg %p151
        %s264 = sand.u32 %s141, 1
        %s265 = scalar_lea.sflag [#allocation4], %s264
        %s266 = sand.u32 %s141, 1
        %s267 = smul.addr %s266, 8
        %s268 = scalar_lea.vmem [#allocation8], %s267
        %v269 = vld [vmem:[%s234] sm:$0xff]
        %v270 = vld [vmem:[#allocation5] sm:$0xff]
        %v271 = vld [vmem:[#allocation5 + $0x8] sm:$0xff]
        %v272 = vld [vmem:[#allocation5 + $0x10] sm:$0xff]
        %v273 = vld [vmem:[#allocation5 + $0x18] sm:$0xff]
        %v274 = vld [vmem:[#allocation5 + $0x20] sm:$0xff]
        %v275 = vld [vmem:[#allocation5 + $0x28] sm:$0xff]
        %v276 = vld [vmem:[#allocation5 + $0x30] sm:$0xff]
        %v277 = vld [vmem:[#allocation5 + $0x38] sm:$0xff]
        %v278 = vld [vmem:[#allocation5 + $0x40] sm:$0xff]
        %v279 = vld [vmem:[#allocation5 + $0x48] sm:$0xff]
        %v280 = vld [vmem:[#allocation5 + $0x50] sm:$0xff]
        %v281 = vld [vmem:[#allocation5 + $0x58] sm:$0xff]
        %v282 = vld [vmem:[#allocation5 + $0x60] sm:$0xff]
        %v283 = vld [vmem:[#allocation5 + $0x68] sm:$0xff]
        %v284 = vld [vmem:[#allocation5 + $0x70] sm:$0xff]
        %v285 = vld [vmem:[#allocation5 + $0x78] sm:$0xff]
        %v286 = vld [vmem:[#allocation5 + $0x80] sm:$0xff]
        %v287 = vld [vmem:[#allocation5 + $0x88] sm:$0xff]
        %v288 = vld [vmem:[#allocation5 + $0x90] sm:$0xff]
        %v289 = vld [vmem:[#allocation5 + $0x98] sm:$0xff]
        %v290 = vld [vmem:[#allocation5 + $0xa0] sm:$0xff]
        %v291 = vld [vmem:[#allocation5 + $0xa8] sm:$0xff]
        %v292 = vld [vmem:[#allocation5 + $0xb0] sm:$0xff]
        %v293 = vld [vmem:[#allocation5 + $0xb8] sm:$0xff]
        %v294 = vld [vmem:[#allocation5 + $0xc0] sm:$0xff]
        %v295 = vld [vmem:[#allocation5 + $0xc8] sm:$0xff]
        %v296 = vld [vmem:[#allocation5 + $0xd0] sm:$0xff]
        %v297 = vld [vmem:[#allocation5 + $0xd8] sm:$0xff]
        %v298 = vld [vmem:[#allocation5 + $0xe0] sm:$0xff]
        %v299 = vld [vmem:[#allocation5 + $0xe8] sm:$0xff]
        %v300 = vld [vmem:[#allocation5 + $0xf0] sm:$0xff]
        %v301 = vld [vmem:[#allocation5 + $0xf8] sm:$0xff]
        %v302 = vld [vmem:[%s2] sm:$0x3]
        %v304 = vlaneseq
        %v305 = vshrl.u32 %v304, 7
        %v306 = vsub.s32 0, %v305
        %v307 = vrot.slane %v302, %v306
        %v308 = vlaneseq
        %v309 = vshrl.u32 %v308, 7
        %v310 = vsub.s32 1, %v309
        %v311 = vrot.slane %v302, %v310
        %314 = vmatprep.subr.mxu0 %v301
        %315 = vmatpush1.msra.mxu0 %v300
        %316 = vmatprep.subr.mxu0 %v299
        %317 = vmatpush1.msra.mxu0 %v298
        %318 = vmatprep.subr.mxu0 %v297
        %319 = vmatpush1.msra.mxu0 %v296
        %320 = vmatprep.subr.mxu0 %v295
        %321 = vmatpush1.msra.mxu0 %v294
        %322 = vmatprep.subr.mxu0 %v293
        %323 = vmatpush1.msra.mxu0 %v292
        %324 = vmatprep.subr.mxu0 %v291
        %325 = vmatpush1.msra.mxu0 %v290
        %326 = vmatprep.subr.mxu0 %v289
        %327 = vmatpush1.msra.mxu0 %v288
        %328 = vmatprep.subr.mxu0 %v287
        %329 = vmatpush1.msra.mxu0 %v286
        %330 = vmatprep.subr.mxu0 %v285
        %331 = vmatpush1.msra.mxu0 %v284
        %332 = vmatprep.subr.mxu0 %v283
        %333 = vmatpush1.msra.mxu0 %v282
        %334 = vmatprep.subr.mxu0 %v281
        %335 = vmatpush1.msra.mxu0 %v280
        %336 = vmatprep.subr.mxu0 %v279
        %337 = vmatpush1.msra.mxu0 %v278
        %338 = vmatprep.subr.mxu0 %v277
        %339 = vmatpush1.msra.mxu0 %v276
        %340 = vmatprep.subr.mxu0 %v275
        %341 = vmatpush1.msra.mxu0 %v274
        %342 = vmatprep.subr.mxu0 %v273
        %343 = vmatpush1.msra.mxu0 %v272
        %344 = vmatprep.subr.mxu0 %v271
        %345 = vmatpush1.msra.mxu0 %v270
        %346 = vmatprep.subr.mxu0 0.0
        %347 = vmatpush2.msra.mxu0 0.0
        %348 = vmatprep.subr.mxu0 0.0
        %349 = vmatpush2.msra.mxu0 0.0
        %350 = vmatprep.subr.mxu0 0.0
        %351 = vmatpush2.msra.mxu0 0.0
        %352 = vmatprep.subr.mxu0 0.0
        %353 = vmatpush2.msra.mxu0 0.0
        %354 = vmatprep.subr.mxu0 0.0
        %355 = vmatpush2.msra.mxu0 0.0
        %356 = vmatprep.subr.mxu0 0.0
        %357 = vmatpush2.msra.mxu0 0.0
        %358 = vmatprep.subr.mxu0 0.0
        %359 = vmatpush2.msra.mxu0 0.0
        %360 = vmatprep.subr.mxu0 0.0
        %361 = vmatpush2.msra.mxu0 0.0
        %362 = vmatprep.subr.mxu0 0.0
        %363 = vmatpush2.msra.mxu0 0.0
        %364 = vmatprep.subr.mxu0 0.0
        %365 = vmatpush2.msra.mxu0 0.0
        %366 = vmatprep.subr.mxu0 0.0
        %367 = vmatpush2.msra.mxu0 0.0
        %368 = vmatprep.subr.mxu0 0.0
        %369 = vmatpush2.msra.mxu0 0.0
        %370 = vmatprep.subr.mxu0 0.0
        %371 = vmatpush2.msra.mxu0 0.0
        %372 = vmatprep.subr.mxu0 0.0
        %373 = vmatpush2.msra.mxu0 0.0
        %374 = vmatprep.subr.mxu0 0.0
        %375 = vmatpush2.msra.mxu0 0.0
        %376 = vmatprep.subr.mxu0 0.0
        %377 = vmatpush2.msra.mxu0 0.0
        %378 = vmatprep.mubr.f32.mxu0 0.0
        %379 = vmatmul.mubr.f32.gmra.mxu0 %v269
        %v380 = vpop.f32.mrf.mxu0
        %v381 = vadd.f32 %v307, %v380
        %v382 = vpop.f32.mrf.mxu0
        %v383 = vadd.f32 %v311, %v382
        %384 = vdwg.mxu0
        %v385 = vmul.f32 %v381, 0.5
        %v386 = vmul.f32 %v383, 0.5
        %v387 = vmul.f32 %v381, %v381
        %v388 = vmul.f32 %v383, %v383
        %v389 = vmul.f32 %v387, %v381
        %v390 = vmul.f32 %v388, %v383
        %v391 = vmul.f32 %v389, 0.044715
        %v392 = vmul.f32 %v390, 0.044715
        %v393 = vadd.f32 %v381, %v391
        %v394 = vadd.f32 %v383, %v392
        %v395 = vmul.f32 %v393, 0.7978846
        %v396 = vmul.f32 %v394, 0.7978846
        %v397 = vtanh.pop %v395
        %v398 = vtanh.pop %v396
        %v399 = vadd.f32 %v397, 1.0
        %v400 = vadd.f32 %v398, 1.0
        %v401 = vmul.f32 %v385, %v399
        %v402 = vmul.f32 %v386, %v400
        %v403 = vld [vmem:[#allocation7] sm:$0xff]
        %v404 = vld [vmem:[#allocation7 + $0x8] sm:$0xff]
        %v405 = vld [vmem:[#allocation7 + $0x10] sm:$0xff]
        %v406 = vld [vmem:[#allocation7 + $0x18] sm:$0xff]
        %v407 = vld [vmem:[#allocation7 + $0x20] sm:$0xff]
        %v408 = vld [vmem:[#allocation7 + $0x28] sm:$0xff]
        %v409 = vld [vmem:[#allocation7 + $0x30] sm:$0xff]
        %v410 = vld [vmem:[#allocation7 + $0x38] sm:$0xff]
        %v411 = vld [vmem:[#allocation7 + $0x40] sm:$0xff]
        %v412 = vld [vmem:[#allocation7 + $0x48] sm:$0xff]
        %v413 = vld [vmem:[#allocation7 + $0x50] sm:$0xff]
        %v414 = vld [vmem:[#allocation7 + $0x58] sm:$0xff]
        %v415 = vld [vmem:[#allocation7 + $0x60] sm:$0xff]
        %v416 = vld [vmem:[#allocation7 + $0x68] sm:$0xff]
        %v417 = vld [vmem:[#allocation7 + $0x70] sm:$0xff]
        %v418 = vld [vmem:[#allocation7 + $0x78] sm:$0xff]
        %v419 = vld [vmem:[#allocation7 + $0x80] sm:$0xff]
        %v420 = vld [vmem:[#allocation7 + $0x88] sm:$0xff]
        %v421 = vld [vmem:[#allocation7 + $0x90] sm:$0xff]
        %v422 = vld [vmem:[#allocation7 + $0x98] sm:$0xff]
        %v423 = vld [vmem:[#allocation7 + $0xa0] sm:$0xff]
        %v424 = vld [vmem:[#allocation7 + $0xa8] sm:$0xff]
        %v425 = vld [vmem:[#allocation7 + $0xb0] sm:$0xff]
        %v426 = vld [vmem:[#allocation7 + $0xb8] sm:$0xff]
        %v427 = vld [vmem:[#allocation7 + $0xc0] sm:$0xff]
        %v428 = vld [vmem:[#allocation7 + $0xc8] sm:$0xff]
        %v429 = vld [vmem:[#allocation7 + $0xd0] sm:$0xff]
        %v430 = vld [vmem:[#allocation7 + $0xd8] sm:$0xff]
        %v431 = vld [vmem:[#allocation7 + $0xe0] sm:$0xff]
        %v432 = vld [vmem:[#allocation7 + $0xe8] sm:$0xff]
        %v433 = vld [vmem:[#allocation7 + $0xf0] sm:$0xff]
        %v434 = vld [vmem:[#allocation7 + $0xf8] sm:$0xff]
        %v435 = vld [vmem:[%s4] sm:$0x1]
        %v437 = vlaneseq
        %v438 = vshrl.u32 %v437, 7
        %v439 = vsub.s32 0, %v438
        %v440 = vrot.slane %v435, %v439
        %442 = vmatprep.subr.mxu0 0.0
        %443 = vmatpush1.msra.mxu0 %v418
        %444 = vmatprep.subr.mxu0 0.0
        %445 = vmatpush1.msra.mxu0 %v417
        %446 = vmatprep.subr.mxu0 0.0
        %447 = vmatpush1.msra.mxu0 %v416
        %448 = vmatprep.subr.mxu0 0.0
        %449 = vmatpush1.msra.mxu0 %v415
        %450 = vmatprep.subr.mxu0 0.0
        %451 = vmatpush1.msra.mxu0 %v414
        %452 = vmatprep.subr.mxu0 0.0
        %453 = vmatpush1.msra.mxu0 %v413
        %454 = vmatprep.subr.mxu0 0.0
        %455 = vmatpush1.msra.mxu0 %v412
        %456 = vmatprep.subr.mxu0 0.0
        %457 = vmatpush1.msra.mxu0 %v411
        %458 = vmatprep.subr.mxu0 0.0
        %459 = vmatpush1.msra.mxu0 %v410
        %460 = vmatprep.subr.mxu0 0.0
        %461 = vmatpush1.msra.mxu0 %v409
        %462 = vmatprep.subr.mxu0 0.0
        %463 = vmatpush1.msra.mxu0 %v408
        %464 = vmatprep.subr.mxu0 0.0
        %465 = vmatpush1.msra.mxu0 %v407
        %466 = vmatprep.subr.mxu0 0.0
        %467 = vmatpush1.msra.mxu0 %v406
        %468 = vmatprep.subr.mxu0 0.0
        %469 = vmatpush1.msra.mxu0 %v405
        %470 = vmatprep.subr.mxu0 0.0
        %471 = vmatpush1.msra.mxu0 %v404
        %472 = vmatprep.subr.mxu0 0.0
        %473 = vmatpush1.msra.mxu0 %v403
        %474 = vmatprep.subr.mxu0 0.0
        %475 = vmatpush2.msra.mxu0 %v434
        %476 = vmatprep.subr.mxu0 0.0
        %477 = vmatpush2.msra.mxu0 %v433
        %478 = vmatprep.subr.mxu0 0.0
        %479 = vmatpush2.msra.mxu0 %v432
        %480 = vmatprep.subr.mxu0 0.0
        %481 = vmatpush2.msra.mxu0 %v431
        %482 = vmatprep.subr.mxu0 0.0
        %483 = vmatpush2.msra.mxu0 %v430
        %484 = vmatprep.subr.mxu0 0.0
        %485 = vmatpush2.msra.mxu0 %v429
        %486 = vmatprep.subr.mxu0 0.0
        %487 = vmatpush2.msra.mxu0 %v428
        %488 = vmatprep.subr.mxu0 0.0
        %489 = vmatpush2.msra.mxu0 %v427
        %490 = vmatprep.subr.mxu0 0.0
        %491 = vmatpush2.msra.mxu0 %v426
        %492 = vmatprep.subr.mxu0 0.0
        %493 = vmatpush2.msra.mxu0 %v425
        %494 = vmatprep.subr.mxu0 0.0
        %495 = vmatpush2.msra.mxu0 %v424
        %496 = vmatprep.subr.mxu0 0.0
        %497 = vmatpush2.msra.mxu0 %v423
        %498 = vmatprep.subr.mxu0 0.0
        %499 = vmatpush2.msra.mxu0 %v422
        %500 = vmatprep.subr.mxu0 0.0
        %501 = vmatpush2.msra.mxu0 %v421
        %502 = vmatprep.subr.mxu0 0.0
        %503 = vmatpush2.msra.mxu0 %v420
        %504 = vmatprep.subr.mxu0 0.0
        %505 = vmatpush2.msra.mxu0 %v419
        %506 = vmatprep.mubr.f32.mxu0 %v402
        %507 = vmatmul.mubr.f32.gmra.mxu0 %v401
        %v508 = vpop.f32.mrf.mxu0
        %v509 = vadd.f32 %v440, %v508
        %v510 = vpop.f32.mrf.mxu0
        %511 = vdwg.mxu0
        %512 = vst [vmem:[%s268] sm:$0xff] %v509
        %s513 = sand.u32 %s141, 1
        %s514 = scalar_lea.sflag [#allocation4], %s513
        %s515 = sand.u32 %s141, 1
        %s516 = smul.addr %s515, 8
        %s517 = scalar_lea.vmem [#allocation8], %s516
        // Predicated region
        $region53: #{tpu_custom_call.1} parent=39 // pred_check
          %p518 = pneg %p151
        $region54: #{tpu_custom_call.1} parent=39 // pred_check_branch
          %520 = sbr.rel (%p518) target = $region56
        $region55: #{tpu_custom_call.1} parent=39 // pred_region
          %s522 = ssub.s32 128, 128
          %523 = vsyncadd %s514, %s522
          %s524 = smul.addr %s23, 128
          %s525 = scalar_lea.hbm %s5, %s524
          %s527 = sshll.u32 %s517, 4
          %s528 = int_to_ptr.vmem [resolvable:$true] %s527
          %530 = dma.vmem_to_hbm [thread:$0]  %s528, 128, %s525, %s514
        $region56: #{tpu_custom_call.1} parent=39 // pred_fallthru
          _
      $region40: #{tpu_custom_call.1} parent=5 // pred_fallthru
        _
      %p531 = scmp.le.s32.totalorder 2, %s18
      // Predicated region
      $region57: #{tpu_custom_call.1} parent=5 // pred_check
        %p532 = pneg %p531
      $region58: #{tpu_custom_call.1} parent=5 // pred_check_branch
        %534 = sbr.rel (%p532) target = $region60
      $region59: #{tpu_custom_call.1} parent=5 // pred_region
        %s535 = ssub.s32 %s18, 2
        // Predicated region
        $region61: #{tpu_custom_call.1} parent=59 // pred_check
          %p536 = pneg %p157
        $region62: #{tpu_custom_call.1} parent=59 // pred_check_branch
          %538 = sbr.rel (%p536) target = $region64
        $region63: #{tpu_custom_call.1} parent=59 // pred_region
          %s539 = sand.u32 %s142, 1
          %s540 = scalar_lea.sflag [#allocation4], %s539
          %s541 = sand.u32 %s142, 1
          %s542 = smul.addr %s541, 8
          %s543 = scalar_lea.vmem [#allocation8], %s542
          %544 = dma.done %s540, 128
        $region64: #{tpu_custom_call.1} parent=59 // pred_fallthru
          _
      $region60: #{tpu_custom_call.1} parent=5 // pred_fallthru
        _
    $region6: #{tpu_custom_call.1} parent=1 // loop_footer
      %s22 = sadd.s32 1, %s18
    $region7: #{tpu_custom_call.1} parent=1 // loop_footer_branch
      %17 = sbr.rel target = $region3
    $region8: #{tpu_custom_call.1} parent=1 // loop_exit
      _
    %545 = vsyncpa [#allocation3], 1
    %s546 = scalar_lea.sflag [#allocation3], 1
    %547 = vsyncpa %s546, 1
    %548 = vsyncpa [#allocation6], 1
    %549 = vsyncpa [#allocation4], 1
    %s550 = scalar_lea.sflag [#allocation4], 1
    %551 = vsyncpa %s550, 1

</llo_original>
